<compile_context>
chip_gen: v7x
topology: tpu7x:2x2x1
jax: 0.10.0
libtpu: 0.0.40
codegen_flags: <defaults>
</compile_context>

<pallas_src>
import functools

import jax
import jax.numpy as jnp
import numpy as np
from jax.experimental import pallas as pl
from jax.experimental.pallas import tpu as pltpu


def _iconv_kernel(xc_ref, w_ref, p_ref, o_ref, *, num_gn_groups, eps, act, nb, hw):
    """One batch-block (nb samples) per grid step.

    xc_ref: (1, K, nb*hw)    im2col patches, K = groups*R_pad (lane-dense nb*hw)
    w_ref:  (C_out, K)       block-diagonal conv weight (groups folded)
    p_ref:  (3, C_out, 1)    [gamma, beta, alpha] (f32)
    o_ref:  (1, C_out, nb*hw) lane-dense output
    """
    # ---- Conv2d (bias=False): ONE MXU matmul, f32 accumulate -------------
    acc = jnp.dot(w_ref[...], xc_ref[0], preferred_element_type=jnp.float32)
    C_out = acc.shape[0]
    Cg = C_out // num_gn_groups

    # ---- GroupNorm(num_gn_groups): single-pass sum / sum-of-squares ------
    # Stats are per (gn_group, sample): reduce over (channels-in-group, hw).
    a4 = acc.reshape(num_gn_groups, Cg, nb, hw)
    inv_n = 1.0 / float(Cg * hw)
    s = jnp.sum(a4, axis=(1, 3), keepdims=True)
    ss = jnp.sum(a4 * a4, axis=(1, 3), keepdims=True)
    mean = s * inv_n
    var = ss * inv_n - mean * mean                     # f32 — keep it that way
    yn = ((a4 - mean) * jax.lax.rsqrt(var + eps)).reshape(C_out, nb * hw)

    z = yn * p_ref[0] + p_ref[1]                       # gamma/beta (C_out,1) bcast

    # ---- Activation (f32 elementwise; safe on v5e) ------------------------
    if act == 'prelu':
        z = jnp.where(z > 0, z, p_ref[2] * z)
    elif act == 'relu':
        z = jnp.maximum(z, 0.0)
    # identity: nothing

    o_ref[0] = z.astype(o_ref.dtype)


def _pick_batch_block(N, K, C_out, HW, xc_itemsize, out_itemsize,
                      budget_bytes=20 * 1024 * 1024):
    """Largest divisor Nb of N s.t. (a) >=2 grid steps when N>=2 (v7x 2 TCs)
    and (b) double-buffered blocks + f32 intermediates fit the VMEM budget."""
    best = 1
    for nb in range(1, N + 1):
        if N % nb:
            continue
        n_blocks = N // nb
        if N >= 2 and n_blocks < 2:
            continue
        L = nb * HW
        footprint = (2 * K * L * xc_itemsize          # xc, double-buffered
                     + 2 * C_out * L * out_itemsize   # out, double-buffered
                     + 3 * C_out * L * 4              # f32 acc/yn/z working set
                     + C_out * K * 4)                 # weight
        if footprint <= budget_bytes:
            best = nb
    return best


def iconv_forward(x, w, gamma, beta, alpha, *, kernel, dilation=1, groups=1,
                  act='identity', num_gn_groups=4, eps=1e-5,
                  mxu_dtype=jnp.bfloat16):
    """nn.Sequential(Conv2d(..., padding='same', bias=False), GroupNorm(4, C_out)) + act."""
    N, C_in, H, W = x.shape
    C_out = w.shape[0]
    assert C_in % groups == 0 and C_out % groups == 0
    assert C_out % num_gn_groups == 0
    C_in_g = C_in // groups
    Cog = C_out // groups
    KH = KW = kernel
    HW = H * W
    R = C_in_g * KH * KW
    R_pad = ((R + 7) // 8) * 8                 # sublane-aligned per group
    K = groups * R_pad

    # PyTorch padding='same' (stride 1): total = dilation*(k-1), extra pad high side.
    total = dilation * (KH - 1)
    lo = total // 2
    hi = total - lo
    x_pad = jnp.pad(x, ((0, 0), (0, 0), (lo, hi), (lo, hi)))

    # im2col once in the wrapper (layout plumbing): rows ordered (c_in_g, ky, kx)
    # to match the row-major flatten of the PyTorch OIHW weight.
    taps = []
    for ky in range(KH):
        for kx in range(KW):
            taps.append(
                x_pad[:, :, ky * dilation:ky * dilation + H,
                            kx * dilation:kx * dilation + W].reshape(N, C_in, HW))
    xc = jnp.stack(taps, axis=2)                       # (N, C_in, KH*KW, HW)
    xc = xc.reshape(N, groups, R, HW)
    xc = jnp.pad(xc, ((0, 0), (0, 0), (0, R_pad - R), (0, 0)))   # zero rows
    xc = xc.reshape(N, K, HW)

    # Block-diagonal weight: (C_out, K) with group g occupying cols [g*R_pad, (g+1)*R_pad).
    w_flat = jnp.pad(w.reshape(groups, Cog, R), ((0, 0), (0, 0), (0, R_pad - R)))
    eye = jnp.eye(groups, dtype=w_flat.dtype)
    w_bd = jnp.einsum('gcr,gh->gchr', w_flat, eye).reshape(C_out, K)

    if mxu_dtype is not None:                          # bf16 operands, f32 accumulate
        xc = xc.astype(mxu_dtype)
        w_bd = w_bd.astype(mxu_dtype)

    # Batch blocking: fold Nb samples into the lane axis.
    Nb = _pick_batch_block(N, K, C_out, HW, xc.dtype.itemsize, x.dtype.itemsize)
    n_blocks = N // Nb
    L = Nb * HW
    # (N, K, HW) -> (n_blocks, K, Nb*HW) with lane order (sample-local, hw).
    xc = xc.reshape(n_blocks, Nb, K, HW).transpose(0, 2, 1, 3).reshape(n_blocks, K, L)

    # gamma/beta/alpha packed into one (3, C_out, 1) f32 input.
    params = jnp.stack([gamma, beta, alpha]).reshape(3, C_out, 1).astype(jnp.float32)

    kern = functools.partial(_iconv_kernel, num_gn_groups=num_gn_groups,
                             eps=eps, act=act, nb=Nb, hw=HW)

    cost = pl.CostEstimate(
        flops=2 * C_out * K * N * HW + 10 * C_out * N * HW,
        transcendentals=N * num_gn_groups,
        bytes_accessed=(xc.size * xc.dtype.itemsize
                        + w_bd.size * w_bd.dtype.itemsize
                        + N * C_out * HW * x.dtype.itemsize
                        + params.size * 4))

    out = pl.pallas_call(
        kern,
        out_shape=jax.ShapeDtypeStruct((n_blocks, C_out, L), x.dtype),
        grid_spec=pltpu.PrefetchScalarGridSpec(
            num_scalar_prefetch=0,
            grid=(n_blocks,),
            in_specs=[
                pl.BlockSpec((1, K, L), lambda b: (b, 0, 0)),
                pl.BlockSpec((C_out, K), lambda b: (0, 0)),
                pl.BlockSpec((3, C_out, 1), lambda b: (0, 0, 0)),
            ],
            out_specs=pl.BlockSpec((1, C_out, L), lambda b: (b, 0, 0)),
        ),
        compiler_params=pltpu.CompilerParams(
            dimension_semantics=("parallel",),          # maps blocks across v7x's 2 TCs
            vmem_limit_bytes=32 * 1024 * 1024),
        cost_estimate=cost,
    )(xc, w_bd, params)

    # (n_blocks, C_out, Nb*HW) -> (N, C_out, H, W)  (wrapper layout plumbing)
    out = out.reshape(n_blocks, C_out, Nb, HW).transpose(0, 2, 1, 3)
    return out.reshape(N, C_out, H, W)


def _ref_forward(x, w, gamma, beta, alpha, *, kernel, dilation, groups, act,
                 num_gn_groups=4, eps=1e-5):
    """Pure-JAX reference matching PyTorch iConv semantics."""
    total = dilation * (kernel - 1)
    lo = total // 2
    hi = total - lo
    y = jax.lax.conv_general_dilated(
        x, w, window_strides=(1, 1), padding=((lo, hi), (lo, hi)),
        rhs_dilation=(dilation, dilation),
        dimension_numbers=('NCHW', 'OIHW', 'NCHW'),
        feature_group_count=groups)
    N, C, H, W = y.shape
    yr = y.reshape(N, num_gn_groups, -1)
    m = yr.mean(-1, keepdims=True)
    v = ((yr - m) ** 2).mean(-1, keepdims=True)
    yn = ((yr - m) / jnp.sqrt(v + eps)).reshape(N, C, H, W)
    z = yn * gamma.reshape(1, C, 1, 1) + beta.reshape(1, C, 1, 1)
    if act == 'prelu':
        z = jnp.where(z > 0, z, alpha.reshape(1, C, 1, 1) * z)
    elif act == 'relu':
        z = jnp.maximum(z, 0.0)
    return z


def _check(x, w, gamma, beta, alpha, cfg):
    ref = _ref_forward(x, w, gamma, beta, alpha, **cfg)
    # Exact (f32 MXU operand) path.
    out_f32 = iconv_forward(x, w, gamma, beta, alpha, mxu_dtype=jnp.float32, **cfg)
    out_f32 = jax.block_until_ready(out_f32)
    np.testing.assert_allclose(np.asarray(out_f32), np.asarray(ref),
                               rtol=1e-4, atol=1e-4)
    # Default (bf16 MXU operand) path — GN re-normalizes, loose tolerance.
    out_bf16 = iconv_forward(x, w, gamma, beta, alpha, **cfg)
    out_bf16 = jax.block_until_ready(out_bf16)
    np.testing.assert_allclose(np.asarray(out_bf16), np.asarray(ref),
                               rtol=5e-2, atol=5e-2)


if __name__ == "__main__":
    key = jax.random.PRNGKey(0)
    N, H, W = 2, 16, 16

    # --- Test 1: iConv(4, 8, kernel=3, dilation=1, groups=1, act='prelu') ---
    C_in, C_out = 4, 8
    k1, k2, k3, k4, k5 = jax.random.split(key, 5)
    x = jax.random.normal(k1, (N, C_in, H, W), dtype=jnp.float32)
    w = 0.1 * jax.random.normal(k2, (C_out, C_in, 3, 3), dtype=jnp.float32)
    gamma = 1.0 + 0.1 * jax.random.normal(k3, (C_out,), dtype=jnp.float32)
    beta = 0.1 * jax.random.normal(k4, (C_out,), dtype=jnp.float32)
    alpha = jnp.full((C_out,), 0.02, dtype=jnp.float32)
    _check(x, w, gamma, beta, alpha,
           dict(kernel=3, dilation=1, groups=1, act='prelu'))

    # --- Test 2: iConv(8, 4, kernel=1, dilation=2, groups=4, act='prelu')  (Decoder D1) ---
    C_in2, C_out2, G2 = 8, 4, 4
    j1, j2, j3, j4, j5 = jax.random.split(k5, 5)
    x2 = jax.random.normal(j1, (N, C_in2, H, W), dtype=jnp.float32)
    w2 = 0.1 * jax.random.normal(j2, (C_out2, C_in2 // G2, 1, 1), dtype=jnp.float32)
    gamma2 = 1.0 + 0.1 * jax.random.normal(j3, (C_out2,), dtype=jnp.float32)
    beta2 = 0.1 * jax.random.normal(j4, (C_out2,), dtype=jnp.float32)
    alpha2 = jnp.full((C_out2,), 0.02, dtype=jnp.float32)
    _check(x2, w2, gamma2, beta2, alpha2,
           dict(kernel=1, dilation=2, groups=4, act='prelu'))

    # --- Test 3: iConv(8, 8, kernel=3, dilation=2, groups=2, act='relu')  (Block.k style) ---
    C_in3, C_out3, G3 = 8, 8, 2
    m1, m2, m3, m4 = jax.random.split(j5, 4)
    x3 = jax.random.normal(m1, (N, C_in3, H, W), dtype=jnp.float32)
    w3 = 0.1 * jax.random.normal(m2, (C_out3, C_in3 // G3, 3, 3), dtype=jnp.float32)
    gamma3 = 1.0 + 0.1 * jax.random.normal(m3, (C_out3,), dtype=jnp.float32)
    beta3 = 0.1 * jax.random.normal(m4, (C_out3,), dtype=jnp.float32)
    alpha3 = jnp.full((C_out3,), 0.02, dtype=jnp.float32)
    _check(x3, w3, gamma3, beta3, alpha3,
           dict(kernel=3, dilation=2, groups=2, act='relu'))

    print("KERNEL_OK")
</pallas_src>

<mosaic_0001>
module attributes {stable_mosaic.version = 11 : i64} {
  func.func @_iconv_kernel(%arg0: i32, %arg1: memref<1x40x256xf32, #tpu.memory_space<vmem>>, %arg2: memref<8x40xf32, #tpu.memory_space<vmem>>, %arg3: memref<3x8x1xf32, #tpu.memory_space<vmem>>, %arg4: memref<1x8x256xf32, #tpu.memory_space<vmem>>) attributes {dimension_semantics = [#tpu.dimension_semantics<parallel>], iteration_bounds = array<i64: 2>, scalar_prefetch = 0 : i64, scratch_operands = 0 : i64, tpu.core_type = #tpu.core_type<tc>, window_params = [{transform_indices = @transform_0, window_bounds = array<i64: 1, 40, 256>}, {pipeline_mode = #tpu.pipeline_mode<synchronous>, transform_indices = @transform_1, window_bounds = array<i64: 8, 40>}, {pipeline_mode = #tpu.pipeline_mode<synchronous>, transform_indices = @transform_2, window_bounds = array<i64: 3, 8, 1>}, {transform_indices = @transform_3, window_bounds = array<i64: 1, 8, 256>}]} {
    %c0 = arith.constant 0 : index
    %c0_0 = arith.constant 0 : index
    %0 = vector.load %arg2[%c0, %c0_0] : memref<8x40xf32, #tpu.memory_space<vmem>>, vector<8x40xf32>
    %c0_1 = arith.constant 0 : index
    %c0_2 = arith.constant 0 : index
    %c0_3 = arith.constant 0 : index
    %1 = vector.load %arg1[%c0_1, %c0_2, %c0_3] : memref<1x40x256xf32, #tpu.memory_space<vmem>>, vector<1x40x256xf32>
    %2 = vector.shape_cast %1 : vector<1x40x256xf32> to vector<40x256xf32>
    %cst = arith.constant dense<0.000000e+00> : vector<8x256xf32>
    %3 = tpu.matmul %0, %2, %cst {dimension_numbers = #tpu.dot_dimension_numbers<[1], [0], [0], [1], [0, 0, 1, 1], [], []>} : vector<8x40xf32>, vector<40x256xf32>, vector<8x256xf32> -> vector<8x256xf32>
    %4 = vector.shape_cast %3 : vector<8x256xf32> to vector<4x2x1x256xf32>
    %cst_4 = arith.constant dense<0.000000e+00> : vector<4x1xf32>
    %5 = vector.multi_reduction <add>, %4, %cst_4 [1, 3] : vector<4x2x1x256xf32> to vector<4x1xf32>
    %6 = vector.shape_cast %5 : vector<4x1xf32> to vector<4x1x1x1xf32>
    %7 = arith.mulf %4, %4 : vector<4x2x1x256xf32>
    %cst_5 = arith.constant dense<0.000000e+00> : vector<4x1xf32>
    %8 = vector.multi_reduction <add>, %7, %cst_5 [1, 3] : vector<4x2x1x256xf32> to vector<4x1xf32>
    %9 = vector.shape_cast %8 : vector<4x1xf32> to vector<4x1x1x1xf32>
    %cst_6 = arith.constant 0.001953125 : f32
    %10 = vector.broadcast %cst_6 : f32 to vector<4x1x1x1xf32>
    %11 = arith.mulf %6, %10 : vector<4x1x1x1xf32>
    %cst_7 = arith.constant 0.001953125 : f32
    %12 = vector.broadcast %cst_7 : f32 to vector<4x1x1x1xf32>
    %13 = arith.mulf %9, %12 : vector<4x1x1x1xf32>
    %14 = arith.mulf %11, %11 : vector<4x1x1x1xf32>
    %15 = arith.subf %13, %14 : vector<4x1x1x1xf32>
    %16 = vector.broadcast %11 : vector<4x1x1x1xf32> to vector<4x2x1x256xf32>
    %17 = arith.subf %4, %16 : vector<4x2x1x256xf32>
    %cst_8 = arith.constant 9.99999974E-6 : f32
    %18 = vector.broadcast %cst_8 : f32 to vector<4x1x1x1xf32>
    %19 = arith.addf %15, %18 : vector<4x1x1x1xf32>
    %20 = math.rsqrt %19 : vector<4x1x1x1xf32>
    %21 = vector.broadcast %20 : vector<4x1x1x1xf32> to vector<4x2x1x256xf32>
    %22 = arith.mulf %17, %21 : vector<4x2x1x256xf32>
    %23 = vector.shape_cast %22 : vector<4x2x1x256xf32> to vector<8x256xf32>
    %c0_9 = arith.constant 0 : index
    %c0_10 = arith.constant 0 : index
    %c0_11 = arith.constant 0 : index
    %24 = vector.load %arg3[%c0_9, %c0_10, %c0_11] : memref<3x8x1xf32, #tpu.memory_space<vmem>>, vector<1x8x1xf32>
    %25 = vector.shape_cast %24 : vector<1x8x1xf32> to vector<8x1xf32>
    %26 = vector.broadcast %25 : vector<8x1xf32> to vector<8x256xf32>
    %27 = arith.mulf %23, %26 : vector<8x256xf32>
    %c1 = arith.constant 1 : index
    %c0_12 = arith.constant 0 : index
    %c0_13 = arith.constant 0 : index
    %28 = vector.load %arg3[%c1, %c0_12, %c0_13] : memref<3x8x1xf32, #tpu.memory_space<vmem>>, vector<1x8x1xf32>
    %29 = vector.shape_cast %28 : vector<1x8x1xf32> to vector<8x1xf32>
    %30 = vector.broadcast %29 : vector<8x1xf32> to vector<8x256xf32>
    %31 = arith.addf %27, %30 : vector<8x256xf32>
    %cst_14 = arith.constant 0.000000e+00 : f32
    %32 = vector.broadcast %cst_14 : f32 to vector<8x256xf32>
    %33 = arith.cmpf ogt, %31, %32 : vector<8x256xf32>
    %c2 = arith.constant 2 : index
    %c0_15 = arith.constant 0 : index
    %c0_16 = arith.constant 0 : index
    %34 = vector.load %arg3[%c2, %c0_15, %c0_16] : memref<3x8x1xf32, #tpu.memory_space<vmem>>, vector<1x8x1xf32>
    %35 = vector.shape_cast %34 : vector<1x8x1xf32> to vector<8x1xf32>
    %36 = vector.broadcast %35 : vector<8x1xf32> to vector<8x256xf32>
    %37 = arith.mulf %36, %31 : vector<8x256xf32>
    %38 = arith.select %33, %31, %37 : vector<8x256xi1>, vector<8x256xf32>
    %c0_17 = arith.constant 0 : index
    %c0_18 = arith.constant 0 : index
    %c0_19 = arith.constant 0 : index
    %39 = vector.load %arg4[%c0_17, %c0_18, %c0_19] : memref<1x8x256xf32, #tpu.memory_space<vmem>>, vector<1x8x256xf32>
    %40 = vector.shape_cast %39 : vector<1x8x256xf32> to vector<8x256xf32>
    %41 = vector.shape_cast %38 : vector<8x256xf32> to vector<1x8x256xf32>
    tpu.vector_store %arg4[%c0_17, %c0_18, %c0_19], %41 {strides = array<i32>} : memref<1x8x256xf32, #tpu.memory_space<vmem>>, vector<1x8x256xf32>,
    return
  }
  func.func @transform_0(%arg0: i32) -> (i32, i32, i32) {
    %c0_i32 = arith.constant 0 : i32
    %c0_i32_0 = arith.constant 0 : i32
    %c0_i32_1 = arith.constant 0 : i32
    return %arg0, %c0_i32, %c0_i32_0 : i32, i32, i32
  }
  func.func @transform_1(%arg0: i32) -> (i32, i32) {
    %c0_i32 = arith.constant 0 : i32
    %c0_i32_0 = arith.constant 0 : i32
    %c0_i32_1 = arith.constant 0 : i32
    return %c0_i32, %c0_i32_0 : i32, i32
  }
  func.func @transform_2(%arg0: i32) -> (i32, i32, i32) {
    %c0_i32 = arith.constant 0 : i32
    %c0_i32_0 = arith.constant 0 : i32
    %c0_i32_1 = arith.constant 0 : i32
    %c0_i32_2 = arith.constant 0 : i32
    return %c0_i32, %c0_i32_0, %c0_i32_1 : i32, i32, i32
  }
  func.func @transform_3(%arg0: i32) -> (i32, i32, i32) {
    %c0_i32 = arith.constant 0 : i32
    %c0_i32_0 = arith.constant 0 : i32
    %c0_i32_1 = arith.constant 0 : i32
    return %arg0, %c0_i32, %c0_i32_0 : i32, i32, i32
  }
}

</mosaic_0001>

<llo_original>
// kernel: tpu_custom_call.1
$region0: #{tpu_custom_call.1}
  #allocation0 [shape = 'u32[]', space=smem, size = 0x4, offset = 0x4, fixed_abs, tag = 'smem constant byte address 0x4 - core index']
  #allocation1 [shape = 'u32[144,128]{1,0:T(1,128)}', space=vmem, size = 0x12000, scoped, tag = 'internal scratch']
  %s0 = inlined_call_operand.hbm [shape: f32[2,40,256], index: 0, kind: input, shape index: {}]
  %s1 = inlined_call_operand.vmem [shape: f32[8,40], index: 1, kind: input, shape index: {}]
  %s2 = inlined_call_operand.vmem [shape: f32[3,8,1], index: 2, kind: input, shape index: {}]
  %s3 = inlined_call_operand.hbm [shape: f32[2,8,256], index: 3, kind: output, shape index: {}]
  %s4 = sld [smem:[#allocation0]]
  $region49: #{tpu_custom_call.1} parent=0
    _
  %s6 = ssub.s32 1, %s4
  %s7 = scalar_select 0, %s6, %s4
  $region1: #{tpu_custom_call.1} parent=0
    #allocation2 [shape = 'u8[81920]{0}', space=vmem, size = 0x14000, scoped, tag = 'input window, operand 0']
    #allocation3 [shape = 's32[2]{0}', space=sflag, size = 0x8, scoped, tag = 'scoped memory for tpu_custom_call.1']
    #allocation4 [shape = 's32[2]{0}', space=sflag, size = 0x8, scoped, tag = 'scoped memory for tpu_custom_call.1']
    #allocation5 [shape = 'u8[16384]{0}', space=vmem, size = 0x4000, scoped, tag = 'output window, operand 0']
    %8 = vsyncpa [#allocation3], 0
    %s9 = scalar_lea.sflag [#allocation3], 1
    %10 = vsyncpa %s9, 0
    %11 = vsyncpa [#allocation4], 0
    %s12 = scalar_lea.sflag [#allocation4], 1
    %13 = vsyncpa %s12, 0
    loop: start=0, step=1, limit=4
    $region2: #{tpu_custom_call.1} parent=1 // loop_pre_header
      _
    $region3: #{tpu_custom_call.1} parent=1 // loop_header
      %s15 = sphi 0, %s19
      %p16 = scmp.ge.s32.totalorder %s15, 4
      %s25 = sphi 0, %s27
      %s28 = sphi 0, %s25
      %s29 = sphi 0, %s28
      %s45 = sphi 0, %s29
      %s49 = sphi 0, %s49
      %s51 = sphi 0, %s49
      %s52 = sphi 0, %s51
      %s66 = sphi 0, %s52
      %s70 = sphi 0, %s70
      %s72 = sphi 0, %s70
      %s73 = sphi 0, %s72
      %s87 = sphi 0, %s73
      %s93 = sphi 0, %s95
      %s96 = sphi 0, %s93
      %s97 = sphi 0, %s96
      %s113 = sphi 0, %s97
    $region4: #{tpu_custom_call.1} parent=1 // loop_header_branch
      %18 = sbr.rel (%p16) target = $region8
    $region5: #{tpu_custom_call.1} parent=1 // loop_body
      %s20 = ssub.s32 %s15, 1
      %s21 = ssub.s32 %s15, 2
      %s22 = sadd.s32 %s15, 1
      %s23 = ssub.s32 %s15, %s22
      %p24 = scmp.eq.s32.totalorder %s23, 0
      %s26 = sadd.s32 %s25, 1
      %s27 = scalar_select %p24, %s25, %s26
      %p30 = pneg %p24
      %p31 = scmp.eq.s32.totalorder %s15, 1
      %p32 = por %p30, %p31
      %p33 = scmp.ne.s32.totalorder %s25, %s28
      %p34 = scmp.eq.s32.totalorder %s15, 0
      %p35 = por %p33, %p34
      %p36 = scmp.ne.s32.totalorder %s25, %s28
      %p37 = scmp.eq.s32.totalorder %s20, 1
      %p38 = por %p36, %p37
      %p39 = scmp.ne.s32.totalorder %s28, %s29
      %p40 = scmp.eq.s32.totalorder %s20, 0
      %p41 = por %p39, %p40
      %p42 = scmp.ne.s32.totalorder %s28, %s29
      %p43 = scmp.eq.s32.totalorder %s21, 1
      %p44 = por %p42, %p43
      %p46 = scmp.ne.s32.totalorder %s29, %s45
      %p47 = scmp.eq.s32.totalorder %s21, 0
      %p48 = por %p46, %p47
      %s50 = sadd.s32 %s49, 1
      %p53 = scmp.eq.s32.totalorder %s15, 1
      %p54 = scmp.ne.s32.totalorder %s49, %s51
      %p55 = scmp.eq.s32.totalorder %s15, 0
      %p56 = por %p54, %p55
      %p57 = scmp.ne.s32.totalorder %s49, %s51
      %p58 = scmp.eq.s32.totalorder %s20, 1
      %p59 = por %p57, %p58
      %p60 = scmp.ne.s32.totalorder %s51, %s52
      %p61 = scmp.eq.s32.totalorder %s20, 0
      %p62 = por %p60, %p61
      %p63 = scmp.ne.s32.totalorder %s51, %s52
      %p64 = scmp.eq.s32.totalorder %s21, 1
      %p65 = por %p63, %p64
      %p67 = scmp.ne.s32.totalorder %s52, %s66
      %p68 = scmp.eq.s32.totalorder %s21, 0
      %p69 = por %p67, %p68
      %s71 = sadd.s32 %s70, 1
      %p74 = scmp.eq.s32.totalorder %s15, 1
      %p75 = scmp.ne.s32.totalorder %s70, %s72
      %p76 = scmp.eq.s32.totalorder %s15, 0
      %p77 = por %p75, %p76
      %p78 = scmp.ne.s32.totalorder %s70, %s72
      %p79 = scmp.eq.s32.totalorder %s20, 1
      %p80 = por %p78, %p79
      %p81 = scmp.ne.s32.totalorder %s72, %s73
      %p82 = scmp.eq.s32.totalorder %s20, 0
      %p83 = por %p81, %p82
      %p84 = scmp.ne.s32.totalorder %s72, %s73
      %p85 = scmp.eq.s32.totalorder %s21, 1
      %p86 = por %p84, %p85
      %p88 = scmp.ne.s32.totalorder %s73, %s87
      %p89 = scmp.eq.s32.totalorder %s21, 0
      %p90 = por %p88, %p89
      %s91 = ssub.s32 %s15, %s22
      %p92 = scmp.eq.s32.totalorder %s91, 0
      %s94 = sadd.s32 %s93, 1
      %s95 = scalar_select %p92, %s93, %s94
      %p98 = pneg %p92
      %p99 = scmp.eq.s32.totalorder %s15, 1
      %p100 = por %p98, %p99
      %p101 = scmp.ne.s32.totalorder %s93, %s96
      %p102 = scmp.eq.s32.totalorder %s15, 0
      %p103 = por %p101, %p102
      %p104 = scmp.ne.s32.totalorder %s93, %s96
      %p105 = scmp.eq.s32.totalorder %s20, 1
      %p106 = por %p104, %p105
      %p107 = scmp.ne.s32.totalorder %s96, %s97
      %p108 = scmp.eq.s32.totalorder %s20, 0
      %p109 = por %p107, %p108
      %p110 = scmp.ne.s32.totalorder %s96, %s97
      %p111 = scmp.eq.s32.totalorder %s21, 1
      %p112 = por %p110, %p111
      %p114 = scmp.ne.s32.totalorder %s97, %s113
      %p115 = scmp.eq.s32.totalorder %s21, 0
      %p116 = por %p114, %p115
      %p117 = scmp.le.s32.totalorder 1, %s15
      %p118 = scmp.lt.s32.totalorder %s15, 3
      %p119 = pnand %p117, %p118
      %p120 = pneg %p119
      // Predicated region
      $region9: #{tpu_custom_call.1} parent=5 // pred_check
        _
      $region10: #{tpu_custom_call.1} parent=5 // pred_check_branch
        %122 = sbr.rel (%p119) target = $region12
      $region11: #{tpu_custom_call.1} parent=5 // pred_region
        %s123 = ssub.s32 %s15, 1
        // Predicated region
        $region13: #{tpu_custom_call.1} parent=11 // pred_check
          %p124 = pneg %p62
        $region14: #{tpu_custom_call.1} parent=11 // pred_check_branch
          %126 = sbr.rel (%p124) target = $region16
        $region15: #{tpu_custom_call.1} parent=11 // pred_region
          _
        $region16: #{tpu_custom_call.1} parent=11 // pred_fallthru
          _
        // Predicated region
        $region17: #{tpu_custom_call.1} parent=11 // pred_check
          %p127 = pneg %p83
        $region18: #{tpu_custom_call.1} parent=11 // pred_check_branch
          %129 = sbr.rel (%p127) target = $region20
        $region19: #{tpu_custom_call.1} parent=11 // pred_region
          _
        $region20: #{tpu_custom_call.1} parent=11 // pred_fallthru
          _
      $region12: #{tpu_custom_call.1} parent=5 // pred_fallthru
        _
      %p130 = scmp.lt.s32.totalorder %s15, 2
      // Predicated region
      $region21: #{tpu_custom_call.1} parent=5 // pred_check
        %p131 = pneg %p130
      $region22: #{tpu_custom_call.1} parent=5 // pred_check_branch
        %133 = sbr.rel (%p131) target = $region24
      $region23: #{tpu_custom_call.1} parent=5 // pred_region
        // Predicated region
        $region25: #{tpu_custom_call.1} parent=23 // pred_check
          %p134 = pneg %p35
        $region26: #{tpu_custom_call.1} parent=23 // pred_check_branch
          %136 = sbr.rel (%p134) target = $region28
        $region27: #{tpu_custom_call.1} parent=23 // pred_region
          %s137 = sand.u32 %s25, 1
          %s138 = scalar_lea.sflag [#allocation3], %s137
          %s139 = sand.u32 %s25, 1
          %s140 = smul.addr %s139, 80
          %s141 = scalar_lea.vmem [#allocation2], %s140
          %s143 = ssub.s32 1280, 1280
          %144 = vsyncadd %s138, %s143
          %s145 = smul.addr %s15, 10
          %s146 = smul.addr %s145, 128
          %s147 = scalar_lea.hbm %s0, %s146
          %s148 = sshll.u32 %s141, 4
          %s149 = int_to_ptr.vmem [resolvable:$true] %s148
          %154 = dma.hbm_to_vmem [thread:$0]  %s147, 1280, %s149, %s138, 256, 256, 16
        $region28: #{tpu_custom_call.1} parent=23 // pred_fallthru
          _
      $region24: #{tpu_custom_call.1} parent=5 // pred_fallthru
        _
      %p155 = scmp.le.s32.totalorder 1, %s15
      %p156 = scmp.lt.s32.totalorder %s15, 3
      %p157 = pnand %p155, %p156
      %p158 = pneg %p157
      // Predicated region
      $region29: #{tpu_custom_call.1} parent=5 // pred_check
        _
      $region30: #{tpu_custom_call.1} parent=5 // pred_check_branch
        %160 = sbr.rel (%p157) target = $region32
      $region31: #{tpu_custom_call.1} parent=5 // pred_region
        %s161 = ssub.s32 %s15, 1
        %s162 = sand.u32 %s28, 1
        %s163 = scalar_lea.sflag [#allocation3], %s162
        %s164 = sand.u32 %s28, 1
        %s165 = smul.addr %s164, 80
        %s166 = scalar_lea.vmem [#allocation2], %s165
        // Predicated region
        $region33: #{tpu_custom_call.1} parent=31 // pred_check
          %p167 = pneg %p41
        $region34: #{tpu_custom_call.1} parent=31 // pred_check_branch
          %169 = sbr.rel (%p167) target = $region36
        $region35: #{tpu_custom_call.1} parent=31 // pred_region
          %170 = dma.done %s163, 1280
        $region36: #{tpu_custom_call.1} parent=31 // pred_fallthru
          _
        %s171 = sand.u32 %s28, 1
        %s172 = scalar_lea.sflag [#allocation3], %s171
        %s173 = sand.u32 %s28, 1
        %s174 = smul.addr %s173, 80
        %s175 = scalar_lea.vmem [#allocation2], %s174
        %p176 = pneg %p41
        %p177 = pneg %p38
        %p178 = pneg %p62
        %p179 = pneg %p59
        %p180 = pneg %p83
        %p181 = pneg %p80
        %p182 = pneg %p109
        %p183 = pneg %p106
        %s184 = sand.u32 %s96, 1
        %s185 = scalar_lea.sflag [#allocation4], %s184
        %s186 = sand.u32 %s96, 1
        %s187 = smul.addr %s186, 16
        %s188 = scalar_lea.vmem [#allocation5], %s187
        %v189 = vld [vmem:[%s1] sm:$0xff]
        %v190 = vld [vmem:[%s166] sm:$0xff]
        %v191 = vld [vmem:[%s166 + $0x8] sm:$0xff]
        %v192 = vld [vmem:[%s166 + $0x10] sm:$0xff]
        %v193 = vld [vmem:[%s166 + $0x18] sm:$0xff]
        %v194 = vld [vmem:[%s166 + $0x20] sm:$0xff]
        %v195 = vld [vmem:[%s166 + $0x28] sm:$0xff]
        %v196 = vld [vmem:[%s166 + $0x30] sm:$0xff]
        %v197 = vld [vmem:[%s166 + $0x38] sm:$0xff]
        %v198 = vld [vmem:[%s166 + $0x40] sm:$0xff]
        %v199 = vld [vmem:[%s166 + $0x48] sm:$0xff]
        %vm200 = vcmask 326656
        %v202 = vsel %vm200, %v189, 0
        %204 = vmatprep.subr.mxu0 %v191
        %205 = vmatpush1.msra.mxu0 %v190
        %206 = vmatprep.subr.mxu0 %v193
        %207 = vmatpush1.msra.mxu0 %v192
        %208 = vmatprep.subr.mxu0 %v195
        %209 = vmatpush1.msra.mxu0 %v194
        %210 = vmatprep.subr.mxu0 %v197
        %211 = vmatpush1.msra.mxu0 %v196
        %212 = vmatprep.subr.mxu0 %v199
        %213 = vmatpush1.msra.mxu0 %v198
        %214 = vmatprep.subr.mxu0 0.0
        %215 = vmatpush1.msra.mxu0 0.0
        %216 = vmatprep.subr.mxu0 0.0
        %217 = vmatpush1.msra.mxu0 0.0
        %218 = vmatprep.subr.mxu0 0.0
        %219 = vmatpush1.msra.mxu0 0.0
        %220 = vmatprep.subr.mxu0 0.0
        %221 = vmatpush1.msra.mxu0 0.0
        %222 = vmatprep.subr.mxu0 0.0
        %223 = vmatpush1.msra.mxu0 0.0
        %224 = vmatprep.subr.mxu0 0.0
        %225 = vmatpush1.msra.mxu0 0.0
        %226 = vmatprep.subr.mxu0 0.0
        %227 = vmatpush1.msra.mxu0 0.0
        %228 = vmatprep.subr.mxu0 0.0
        %229 = vmatpush1.msra.mxu0 0.0
        %230 = vmatprep.subr.mxu0 0.0
        %231 = vmatpush1.msra.mxu0 0.0
        %232 = vmatprep.subr.mxu0 0.0
        %233 = vmatpush1.msra.mxu0 0.0
        %234 = vmatprep.subr.mxu0 0.0
        %235 = vmatpush1.msra.mxu0 0.0
        %236 = vmatprep.subr.mxu0 0.0
        %237 = vmatpush1.msra.mxu0 0.0
        %238 = vmatprep.subr.mxu0 0.0
        %239 = vmatpush1.msra.mxu0 0.0
        %240 = vmatprep.subr.mxu0 0.0
        %241 = vmatpush1.msra.mxu0 0.0
        %242 = vmatprep.subr.mxu0 0.0
        %243 = vmatpush1.msra.mxu0 0.0
        %244 = vmatprep.subr.mxu0 0.0
        %245 = vmatpush1.msra.mxu0 0.0
        %246 = vmatprep.subr.mxu0 0.0
        %247 = vmatpush1.msra.mxu0 0.0
        %248 = vmatprep.subr.mxu0 0.0
        %249 = vmatpush1.msra.mxu0 0.0
        %250 = vmatprep.subr.mxu0 0.0
        %251 = vmatpush1.msra.mxu0 0.0
        %252 = vmatprep.subr.mxu0 0.0
        %253 = vmatpush1.msra.mxu0 0.0
        %254 = vmatprep.subr.mxu0 0.0
        %255 = vmatpush1.msra.mxu0 0.0
        %256 = vmatprep.subr.mxu0 0.0
        %257 = vmatpush1.msra.mxu0 0.0
        %258 = vmatprep.subr.mxu0 0.0
        %259 = vmatpush1.msra.mxu0 0.0
        %260 = vmatprep.subr.mxu0 0.0
        %261 = vmatpush1.msra.mxu0 0.0
        %262 = vmatprep.subr.mxu0 0.0
        %263 = vmatpush1.msra.mxu0 0.0
        %264 = vmatprep.subr.mxu0 0.0
        %265 = vmatpush1.msra.mxu0 0.0
        %266 = vmatprep.subr.mxu0 0.0
        %267 = vmatpush1.msra.mxu0 0.0
        %268 = vmatprep.mubr.f32.mxu0 0.0
        %269 = vmatmul.mubr.f32.gmra.mrb[0].mxu0 %v202
        %v270 = vpop.f32.mrb[0].mxu0
        %v271 = vadd.f32 0.0, %v270
        %v272 = vpop.f32.mrb[0].mxu0
        %v273 = vadd.f32 0.0, %v272
        %274 = vdwg.mxu0
        %v277 = vcombine.low %v271, %v273
        %v278 = vcombine.high %v271, %v273
        %v280 = vunpack.c.l.s4 1966171168
        %v281 = vunpack.c.0.s8 %v280
        %v282 = vlaneseq
        %v283 = vshrl.u32 %v282, 7
        %v284 = vsub.s32 %v281, %v283
        %v285 = vrot.slane %v277, %v284
        %v287 = vunpack.c.l.s4 1966171168
        %v288 = vunpack.c.0.s8 %v287
        %v289 = vlaneseq
        %v290 = vshrl.u32 %v289, 7
        %v291 = vsub.s32 %v288, %v290
        %v292 = vrot.slane %v278, %v291
        %v293 = vcombine.high %v285, %v285
        %v294 = vcombine.high %v292, %v292
        %v296 = vunpack.c.l.s4 1966171168
        %v297 = vunpack.c.0.s8 %v296
        %v298 = vlaneseq
        %v299 = vshrl.u32 %v298, 7
        %v300 = vsub.s32 %v297, %v299
        %v301 = vrot.slane %v285, %v300
        %v303 = vunpack.c.l.s4 1966171168
        %v304 = vunpack.c.0.s8 %v303
        %v305 = vlaneseq
        %v306 = vshrl.u32 %v305, 7
        %v307 = vsub.s32 %v304, %v306
        %v308 = vrot.slane %v292, %v307
        %v310 = vunpack.c.l.s4 1966171168
        %v311 = vunpack.c.0.s8 %v310
        %v312 = vlaneseq
        %v313 = vshrl.u32 %v312, 7
        %v314 = vsub.s32 %v311, %v313
        %v315 = vrot.slane %v293, %v314
        %v317 = vunpack.c.l.s4 1966171168
        %v318 = vunpack.c.0.s8 %v317
        %v319 = vlaneseq
        %v320 = vshrl.u32 %v319, 7
        %v321 = vsub.s32 %v318, %v320
        %v322 = vrot.slane %v294, %v321
        %v323 = vcombine.high %v301, %v301
        %v324 = vcombine.high %v308, %v308
        %v325 = vcombine.high %v315, %v315
        %v326 = vcombine.high %v322, %v322
        %v335 = vlaneseq
        %v336 = vshrl.u32 %v335, 7
        %v337 = vsub.s32 0, %v336
        %v338 = vrot.slane %v301, %v337
        %v339 = vlaneseq
        %v340 = vshrl.u32 %v339, 7
        %v341 = vsub.s32 1, %v340
        %v342 = vrot.slane %v301, %v341
        %v343 = vlaneseq
        %v344 = vshrl.u32 %v343, 7
        %v345 = vsub.s32 0, %v344
        %v346 = vrot.slane %v315, %v345
        %v347 = vlaneseq
        %v348 = vshrl.u32 %v347, 7
        %v349 = vsub.s32 1, %v348
        %v350 = vrot.slane %v315, %v349
        %v351 = vlaneseq
        %v352 = vshrl.u32 %v351, 7
        %v353 = vsub.s32 0, %v352
        %v354 = vrot.slane %v323, %v353
        %v355 = vlaneseq
        %v356 = vshrl.u32 %v355, 7
        %v357 = vsub.s32 1, %v356
        %v358 = vrot.slane %v323, %v357
        %v359 = vlaneseq
        %v360 = vshrl.u32 %v359, 7
        %v361 = vsub.s32 0, %v360
        %v362 = vrot.slane %v325, %v361
        %v363 = vlaneseq
        %v364 = vshrl.u32 %v363, 7
        %v365 = vsub.s32 1, %v364
        %v366 = vrot.slane %v325, %v365
        %v367 = vlaneseq
        %v368 = vshrl.u32 %v367, 7
        %v369 = vsub.s32 0, %v368
        %v370 = vrot.slane %v308, %v369
        %v371 = vlaneseq
        %v372 = vshrl.u32 %v371, 7
        %v373 = vsub.s32 1, %v372
        %v374 = vrot.slane %v308, %v373
        %v375 = vlaneseq
        %v376 = vshrl.u32 %v375, 7
        %v377 = vsub.s32 0, %v376
        %v378 = vrot.slane %v322, %v377
        %v379 = vlaneseq
        %v380 = vshrl.u32 %v379, 7
        %v381 = vsub.s32 1, %v380
        %v382 = vrot.slane %v322, %v381
        %v383 = vlaneseq
        %v384 = vshrl.u32 %v383, 7
        %v385 = vsub.s32 0, %v384
        %v386 = vrot.slane %v324, %v385
        %v387 = vlaneseq
        %v388 = vshrl.u32 %v387, 7
        %v389 = vsub.s32 1, %v388
        %v390 = vrot.slane %v324, %v389
        %v391 = vlaneseq
        %v392 = vshrl.u32 %v391, 7
        %v393 = vsub.s32 0, %v392
        %v394 = vrot.slane %v326, %v393
        %v395 = vlaneseq
        %v396 = vshrl.u32 %v395, 7
        %v397 = vsub.s32 1, %v396
        %v398 = vrot.slane %v326, %v397
        %vm415 = vcmask 1040384
        %v416 = vsel %vm415, %v338, 0.0
        %v417 = vsel %vm415, %v342, 0.0
        %v418 = vadd.f32 %v416, %v417
        %v419 = vsel %vm415, %v346, 0.0
        %v420 = vadd.f32 %v418, %v419
        %v421 = vsel %vm415, %v350, 0.0
        %v422 = vadd.f32 %v420, %v421
        %423 = vadd.xlane.f32.xlu0 %v422
        %v424 = vpop.xlane.xlu0 %423
        %v425 = vsel %vm415, %v354, 0.0
        %v426 = vsel %vm415, %v358, 0.0
        %v427 = vadd.f32 %v425, %v426
        %v428 = vsel %vm415, %v362, 0.0
        %v429 = vadd.f32 %v427, %v428
        %v430 = vsel %vm415, %v366, 0.0
        %v431 = vadd.f32 %v429, %v430
        %432 = vadd.xlane.f32.xlu0 %v431
        %v433 = vpop.xlane.xlu0 %432
        %v434 = vsel %vm415, %v370, 0.0
        %v435 = vsel %vm415, %v374, 0.0
        %v436 = vadd.f32 %v434, %v435
        %v437 = vsel %vm415, %v378, 0.0
        %v438 = vadd.f32 %v436, %v437
        %v439 = vsel %vm415, %v382, 0.0
        %v440 = vadd.f32 %v438, %v439
        %441 = vadd.xlane.f32.xlu0 %v440
        %v442 = vpop.xlane.xlu0 %441
        %v443 = vsel %vm415, %v386, 0.0
        %v444 = vsel %vm415, %v390, 0.0
        %v445 = vadd.f32 %v443, %v444
        %v446 = vsel %vm415, %v394, 0.0
        %v447 = vadd.f32 %v445, %v446
        %v448 = vsel %vm415, %v398, 0.0
        %v449 = vadd.f32 %v447, %v448
        %450 = vadd.xlane.f32.xlu0 %v449
        %v451 = vpop.xlane.xlu0 %450
        %v452 = vmul.f32 %v301, %v301
        %v453 = vmul.f32 %v315, %v315
        %v454 = vmul.f32 %v323, %v323
        %v455 = vmul.f32 %v325, %v325
        %v456 = vmul.f32 %v308, %v308
        %v457 = vmul.f32 %v322, %v322
        %v458 = vmul.f32 %v324, %v324
        %v459 = vmul.f32 %v326, %v326
        %v468 = vlaneseq
        %v469 = vshrl.u32 %v468, 7
        %v470 = vsub.s32 0, %v469
        %v471 = vrot.slane %v452, %v470
        %v472 = vlaneseq
        %v473 = vshrl.u32 %v472, 7
        %v474 = vsub.s32 1, %v473
        %v475 = vrot.slane %v452, %v474
        %v476 = vlaneseq
        %v477 = vshrl.u32 %v476, 7
        %v478 = vsub.s32 0, %v477
        %v479 = vrot.slane %v453, %v478
        %v480 = vlaneseq
        %v481 = vshrl.u32 %v480, 7
        %v482 = vsub.s32 1, %v481
        %v483 = vrot.slane %v453, %v482
        %v484 = vlaneseq
        %v485 = vshrl.u32 %v484, 7
        %v486 = vsub.s32 0, %v485
        %v487 = vrot.slane %v454, %v486
        %v488 = vlaneseq
        %v489 = vshrl.u32 %v488, 7
        %v490 = vsub.s32 1, %v489
        %v491 = vrot.slane %v454, %v490
        %v492 = vlaneseq
        %v493 = vshrl.u32 %v492, 7
        %v494 = vsub.s32 0, %v493
        %v495 = vrot.slane %v455, %v494
        %v496 = vlaneseq
        %v497 = vshrl.u32 %v496, 7
        %v498 = vsub.s32 1, %v497
        %v499 = vrot.slane %v455, %v498
        %v500 = vlaneseq
        %v501 = vshrl.u32 %v500, 7
        %v502 = vsub.s32 0, %v501
        %v503 = vrot.slane %v456, %v502
        %v504 = vlaneseq
        %v505 = vshrl.u32 %v504, 7
        %v506 = vsub.s32 1, %v505
        %v507 = vrot.slane %v456, %v506
        %v508 = vlaneseq
        %v509 = vshrl.u32 %v508, 7
        %v510 = vsub.s32 0, %v509
        %v511 = vrot.slane %v457, %v510
        %v512 = vlaneseq
        %v513 = vshrl.u32 %v512, 7
        %v514 = vsub.s32 1, %v513
        %v515 = vrot.slane %v457, %v514
        %v516 = vlaneseq
        %v517 = vshrl.u32 %v516, 7
        %v518 = vsub.s32 0, %v517
        %v519 = vrot.slane %v458, %v518
        %v520 = vlaneseq
        %v521 = vshrl.u32 %v520, 7
        %v522 = vsub.s32 1, %v521
        %v523 = vrot.slane %v458, %v522
        %v524 = vlaneseq
        %v525 = vshrl.u32 %v524, 7
        %v526 = vsub.s32 0, %v525
        %v527 = vrot.slane %v459, %v526
        %v528 = vlaneseq
        %v529 = vshrl.u32 %v528, 7
        %v530 = vsub.s32 1, %v529
        %v531 = vrot.slane %v459, %v530
        %v548 = vsel %vm415, %v471, 0.0
        %v549 = vsel %vm415, %v475, 0.0
        %v550 = vadd.f32 %v548, %v549
        %v551 = vsel %vm415, %v479, 0.0
        %v552 = vadd.f32 %v550, %v551
        %v553 = vsel %vm415, %v483, 0.0
        %v554 = vadd.f32 %v552, %v553
        %555 = vadd.xlane.f32.xlu0 %v554
        %v556 = vpop.xlane.xlu0 %555
        %v557 = vsel %vm415, %v487, 0.0
        %v558 = vsel %vm415, %v491, 0.0
        %v559 = vadd.f32 %v557, %v558
        %v560 = vsel %vm415, %v495, 0.0
        %v561 = vadd.f32 %v559, %v560
        %v562 = vsel %vm415, %v499, 0.0
        %v563 = vadd.f32 %v561, %v562
        %564 = vadd.xlane.f32.xlu0 %v563
        %v565 = vpop.xlane.xlu0 %564
        %v566 = vsel %vm415, %v503, 0.0
        %v567 = vsel %vm415, %v507, 0.0
        %v568 = vadd.f32 %v566, %v567
        %v569 = vsel %vm415, %v511, 0.0
        %v570 = vadd.f32 %v568, %v569
        %v571 = vsel %vm415, %v515, 0.0
        %v572 = vadd.f32 %v570, %v571
        %573 = vadd.xlane.f32.xlu0 %v572
        %v574 = vpop.xlane.xlu0 %573
        %v575 = vsel %vm415, %v519, 0.0
        %v576 = vsel %vm415, %v523, 0.0
        %v577 = vadd.f32 %v575, %v576
        %v578 = vsel %vm415, %v527, 0.0
        %v579 = vadd.f32 %v577, %v578
        %v580 = vsel %vm415, %v531, 0.0
        %v581 = vadd.f32 %v579, %v580
        %582 = vadd.xlane.f32.xlu0 %v581
        %v583 = vpop.xlane.xlu0 %582
        %v584 = vmul.f32 %v424, 0.001953125
        %v585 = vmul.f32 %v433, 0.001953125
        %v586 = vmul.f32 %v442, 0.001953125
        %v587 = vmul.f32 %v451, 0.001953125
        %v588 = vmul.f32 %v556, 0.001953125
        %v589 = vmul.f32 %v565, 0.001953125
        %v590 = vmul.f32 %v574, 0.001953125
        %v591 = vmul.f32 %v583, 0.001953125
        %v592 = vmul.f32 %v584, %v584
        %v593 = vmul.f32 %v585, %v585
        %v594 = vmul.f32 %v586, %v586
        %v595 = vmul.f32 %v587, %v587
        %v596 = vsub.f32 %v588, %v592
        %v597 = vsub.f32 %v589, %v593
        %v598 = vsub.f32 %v590, %v594
        %v599 = vsub.f32 %v591, %v595
        %v604 = vlaneseq
        %v605 = vshrl.u32 %v604, 7
        %v606 = vsub.s32 0, %v605
        %v607 = vrot.slane %v584, %v606
        %v608 = vlaneseq
        %v609 = vshrl.u32 %v608, 7
        %v610 = vsub.s32 0, %v609
        %v611 = vrot.slane %v585, %v610
        %v612 = vlaneseq
        %v613 = vshrl.u32 %v612, 7
        %v614 = vsub.s32 0, %v613
        %v615 = vrot.slane %v586, %v614
        %v616 = vlaneseq
        %v617 = vshrl.u32 %v616, 7
        %v618 = vsub.s32 0, %v617
        %v619 = vrot.slane %v587, %v618
        %v624 = vsub.f32 %v301, %v607
        %v625 = vsub.f32 %v315, %v607
        %v626 = vsub.f32 %v323, %v611
        %v627 = vsub.f32 %v325, %v611
        %v628 = vsub.f32 %v308, %v615
        %v629 = vsub.f32 %v322, %v615
        %v630 = vsub.f32 %v324, %v619
        %v631 = vsub.f32 %v326, %v619
        %v632 = vadd.f32 %v596, 1e-05
        %v633 = vadd.f32 %v597, 1e-05
        %v634 = vadd.f32 %v598, 1e-05
        %v635 = vadd.f32 %v599, 1e-05
        %v636 = vrsqrt.pop %v632
        %v637 = vrsqrt.pop %v633
        %v638 = vrsqrt.pop %v634
        %v639 = vrsqrt.pop %v635
        %v644 = vlaneseq
        %v645 = vshrl.u32 %v644, 7
        %v646 = vsub.s32 0, %v645
        %v647 = vrot.slane %v636, %v646
        %v648 = vlaneseq
        %v649 = vshrl.u32 %v648, 7
        %v650 = vsub.s32 0, %v649
        %v651 = vrot.slane %v637, %v650
        %v652 = vlaneseq
        %v653 = vshrl.u32 %v652, 7
        %v654 = vsub.s32 0, %v653
        %v655 = vrot.slane %v638, %v654
        %v656 = vlaneseq
        %v657 = vshrl.u32 %v656, 7
        %v658 = vsub.s32 0, %v657
        %v659 = vrot.slane %v639, %v658
        %v664 = vmul.f32 %v624, %v647
        %v665 = vmul.f32 %v625, %v647
        %v666 = vmul.f32 %v626, %v651
        %v667 = vmul.f32 %v627, %v651
        %v668 = vmul.f32 %v628, %v655
        %v669 = vmul.f32 %v629, %v655
        %v670 = vmul.f32 %v630, %v659
        %v671 = vmul.f32 %v631, %v659
        %v672 = vld [vmem:[%s2] sm:$0xff]
        %674 = vset.pattern.permute.xlu0 0
        %675 = vperm.xlu0 %674, %v672
        %v676 = vpop.permute.xlu0 %675
        %v677 = vlaneseq
        %v678 = vshrl.u32 %v677, 7
        %v679 = vsub.s32 0, %v678
        %v680 = vrot.slane %v676, %v679
        %v681 = vlaneseq
        %v682 = vshrl.u32 %v681, 7
        %v683 = vsub.s32 1, %v682
        %v684 = vrot.slane %v676, %v683
        %v685 = vlaneseq
        %v686 = vshrl.u32 %v685, 7
        %v687 = vsub.s32 2, %v686
        %v688 = vrot.slane %v676, %v687
        %v689 = vlaneseq
        %v690 = vshrl.u32 %v689, 7
        %v691 = vsub.s32 3, %v690
        %v692 = vrot.slane %v676, %v691
        %v693 = vlaneseq
        %v694 = vshrl.u32 %v693, 7
        %v695 = vsub.s32 4, %v694
        %v696 = vrot.slane %v676, %v695
        %v697 = vlaneseq
        %v698 = vshrl.u32 %v697, 7
        %v699 = vsub.s32 5, %v698
        %v700 = vrot.slane %v676, %v699
        %v701 = vlaneseq
        %v702 = vshrl.u32 %v701, 7
        %v703 = vsub.s32 6, %v702
        %v704 = vrot.slane %v676, %v703
        %v705 = vlaneseq
        %v706 = vshrl.u32 %v705, 7
        %v707 = vsub.s32 7, %v706
        %v708 = vrot.slane %v676, %v707
        %v717 = vmul.f32 %v664, %v680
        %v718 = vmul.f32 %v665, %v684
        %v719 = vmul.f32 %v666, %v688
        %v720 = vmul.f32 %v667, %v692
        %v721 = vmul.f32 %v668, %v696
        %v722 = vmul.f32 %v669, %v700
        %v723 = vmul.f32 %v670, %v704
        %v724 = vmul.f32 %v671, %v708
        %s725 = scalar_lea.vmem %s2, 8
        %v726 = vld [vmem:[%s725] sm:$0xff]
        %728 = vset.pattern.permute.xlu0 0
        %729 = vperm.xlu0 %728, %v726
        %v730 = vpop.permute.xlu0 %729
        %v731 = vlaneseq
        %v732 = vshrl.u32 %v731, 7
        %v733 = vsub.s32 0, %v732
        %v734 = vrot.slane %v730, %v733
        %v735 = vlaneseq
        %v736 = vshrl.u32 %v735, 7
        %v737 = vsub.s32 1, %v736
        %v738 = vrot.slane %v730, %v737
        %v739 = vlaneseq
        %v740 = vshrl.u32 %v739, 7
        %v741 = vsub.s32 2, %v740
        %v742 = vrot.slane %v730, %v741
        %v743 = vlaneseq
        %v744 = vshrl.u32 %v743, 7
        %v745 = vsub.s32 3, %v744
        %v746 = vrot.slane %v730, %v745
        %v747 = vlaneseq
        %v748 = vshrl.u32 %v747, 7
        %v749 = vsub.s32 4, %v748
        %v750 = vrot.slane %v730, %v749
        %v751 = vlaneseq
        %v752 = vshrl.u32 %v751, 7
        %v753 = vsub.s32 5, %v752
        %v754 = vrot.slane %v730, %v753
        %v755 = vlaneseq
        %v756 = vshrl.u32 %v755, 7
        %v757 = vsub.s32 6, %v756
        %v758 = vrot.slane %v730, %v757
        %v759 = vlaneseq
        %v760 = vshrl.u32 %v759, 7
        %v761 = vsub.s32 7, %v760
        %v762 = vrot.slane %v730, %v761
        %v771 = vadd.f32 %v717, %v734
        %v772 = vadd.f32 %v718, %v738
        %v773 = vadd.f32 %v719, %v742
        %v774 = vadd.f32 %v720, %v746
        %v775 = vadd.f32 %v721, %v750
        %v776 = vadd.f32 %v722, %v754
        %v777 = vadd.f32 %v723, %v758
        %v778 = vadd.f32 %v724, %v762
        %vm779 = vcmp.gt.f32.partialorder %v771, 0.0
        %vm780 = vcmp.gt.f32.partialorder %v772, 0.0
        %vm781 = vcmp.gt.f32.partialorder %v773, 0.0
        %vm782 = vcmp.gt.f32.partialorder %v774, 0.0
        %vm783 = vcmp.gt.f32.partialorder %v775, 0.0
        %vm784 = vcmp.gt.f32.partialorder %v776, 0.0
        %vm785 = vcmp.gt.f32.partialorder %v777, 0.0
        %vm786 = vcmp.gt.f32.partialorder %v778, 0.0
        %s787 = scalar_lea.vmem %s2, 16
        %v788 = vld [vmem:[%s787] sm:$0xff]
        %790 = vset.pattern.permute.xlu0 0
        %791 = vperm.xlu0 %790, %v788
        %v792 = vpop.permute.xlu0 %791
        %v802 = vcombine.low %v771, %v772
        %v803 = vcombine.low %v773, %v774
        %v804 = vcombine.low %v775, %v776
        %v805 = vcombine.low %v777, %v778
        %v807 = vunpack.c.l.s4 1966171168
        %v808 = vunpack.c.0.s8 %v807
        %v809 = vlaneseq
        %v810 = vshrl.u32 %v809, 7
        %v811 = vsub.s32 %v808, %v810
        %v812 = vrot.slane %v802, %v811
        %v814 = vunpack.c.l.s4 1966171168
        %v815 = vunpack.c.0.s8 %v814
        %v816 = vlaneseq
        %v817 = vshrl.u32 %v816, 7
        %v818 = vsub.s32 %v815, %v817
        %v819 = vrot.slane %v803, %v818
        %v821 = vunpack.c.l.s4 1966171168
        %v822 = vunpack.c.0.s8 %v821
        %v823 = vlaneseq
        %v824 = vshrl.u32 %v823, 7
        %v825 = vsub.s32 %v822, %v824
        %v826 = vrot.slane %v804, %v825
        %v828 = vunpack.c.l.s4 1966171168
        %v829 = vunpack.c.0.s8 %v828
        %v830 = vlaneseq
        %v831 = vshrl.u32 %v830, 7
        %v832 = vsub.s32 %v829, %v831
        %v833 = vrot.slane %v805, %v832
        %v834 = vcombine.low %v812, %v819
        %v835 = vcombine.high %v812, %v819
        %v836 = vcombine.low %v826, %v833
        %v837 = vcombine.high %v826, %v833
        %v839 = vunpack.c.l.s4 1966171168
        %v840 = vunpack.c.0.s8 %v839
        %v841 = vlaneseq
        %v842 = vshrl.u32 %v841, 7
        %v843 = vsub.s32 %v840, %v842
        %v844 = vrot.slane %v834, %v843
        %v846 = vunpack.c.l.s4 1966171168
        %v847 = vunpack.c.0.s8 %v846
        %v848 = vlaneseq
        %v849 = vshrl.u32 %v848, 7
        %v850 = vsub.s32 %v847, %v849
        %v851 = vrot.slane %v835, %v850
        %v853 = vunpack.c.l.s4 1966171168
        %v854 = vunpack.c.0.s8 %v853
        %v855 = vlaneseq
        %v856 = vshrl.u32 %v855, 7
        %v857 = vsub.s32 %v854, %v856
        %v858 = vrot.slane %v836, %v857
        %v860 = vunpack.c.l.s4 1966171168
        %v861 = vunpack.c.0.s8 %v860
        %v862 = vlaneseq
        %v863 = vshrl.u32 %v862, 7
        %v864 = vsub.s32 %v861, %v863
        %v865 = vrot.slane %v837, %v864
        %v866 = vcombine.low %v844, %v858
        %v867 = vcombine.low %v851, %v865
        %v870 = vmul.f32 %v792, %v866
        %v871 = vmul.f32 %v792, %v867
        %v874 = vcombine.low %v870, %v871
        %v875 = vcombine.high %v870, %v871
        %v877 = vunpack.c.l.s4 1966171168
        %v878 = vunpack.c.0.s8 %v877
        %v879 = vlaneseq
        %v880 = vshrl.u32 %v879, 7
        %v881 = vsub.s32 %v878, %v880
        %v882 = vrot.slane %v874, %v881
        %v884 = vunpack.c.l.s4 1966171168
        %v885 = vunpack.c.0.s8 %v884
        %v886 = vlaneseq
        %v887 = vshrl.u32 %v886, 7
        %v888 = vsub.s32 %v885, %v887
        %v889 = vrot.slane %v875, %v888
        %v890 = vcombine.high %v882, %v882
        %v891 = vcombine.high %v889, %v889
        %v893 = vunpack.c.l.s4 1966171168
        %v894 = vunpack.c.0.s8 %v893
        %v895 = vlaneseq
        %v896 = vshrl.u32 %v895, 7
        %v897 = vsub.s32 %v894, %v896
        %v898 = vrot.slane %v882, %v897
        %v900 = vunpack.c.l.s4 1966171168
        %v901 = vunpack.c.0.s8 %v900
        %v902 = vlaneseq
        %v903 = vshrl.u32 %v902, 7
        %v904 = vsub.s32 %v901, %v903
        %v905 = vrot.slane %v889, %v904
        %v907 = vunpack.c.l.s4 1966171168
        %v908 = vunpack.c.0.s8 %v907
        %v909 = vlaneseq
        %v910 = vshrl.u32 %v909, 7
        %v911 = vsub.s32 %v908, %v910
        %v912 = vrot.slane %v890, %v911
        %v914 = vunpack.c.l.s4 1966171168
        %v915 = vunpack.c.0.s8 %v914
        %v916 = vlaneseq
        %v917 = vshrl.u32 %v916, 7
        %v918 = vsub.s32 %v915, %v917
        %v919 = vrot.slane %v891, %v918
        %v920 = vcombine.high %v898, %v898
        %v921 = vcombine.high %v905, %v905
        %v922 = vcombine.high %v912, %v912
        %v923 = vcombine.high %v919, %v919
        %v932 = vsel %vm779, %v771, %v898
        %v933 = vsel %vm780, %v772, %v912
        %v934 = vsel %vm781, %v773, %v920
        %v935 = vsel %vm782, %v774, %v922
        %v936 = vsel %vm783, %v775, %v905
        %v937 = vsel %vm784, %v776, %v919
        %v938 = vsel %vm785, %v777, %v921
        %v939 = vsel %vm786, %v778, %v923
        %v948 = vcombine.low %v932, %v933
        %v949 = vcombine.low %v934, %v935
        %v950 = vcombine.low %v936, %v937
        %v951 = vcombine.low %v938, %v939
        %v953 = vunpack.c.l.s4 1966171168
        %v954 = vunpack.c.0.s8 %v953
        %v955 = vlaneseq
        %v956 = vshrl.u32 %v955, 7
        %v957 = vsub.s32 %v954, %v956
        %v958 = vrot.slane %v948, %v957
        %v960 = vunpack.c.l.s4 1966171168
        %v961 = vunpack.c.0.s8 %v960
        %v962 = vlaneseq
        %v963 = vshrl.u32 %v962, 7
        %v964 = vsub.s32 %v961, %v963
        %v965 = vrot.slane %v949, %v964
        %v967 = vunpack.c.l.s4 1966171168
        %v968 = vunpack.c.0.s8 %v967
        %v969 = vlaneseq
        %v970 = vshrl.u32 %v969, 7
        %v971 = vsub.s32 %v968, %v970
        %v972 = vrot.slane %v950, %v971
        %v974 = vunpack.c.l.s4 1966171168
        %v975 = vunpack.c.0.s8 %v974
        %v976 = vlaneseq
        %v977 = vshrl.u32 %v976, 7
        %v978 = vsub.s32 %v975, %v977
        %v979 = vrot.slane %v951, %v978
        %v980 = vcombine.low %v958, %v965
        %v981 = vcombine.high %v958, %v965
        %v982 = vcombine.low %v972, %v979
        %v983 = vcombine.high %v972, %v979
        %v985 = vunpack.c.l.s4 1966171168
        %v986 = vunpack.c.0.s8 %v985
        %v987 = vlaneseq
        %v988 = vshrl.u32 %v987, 7
        %v989 = vsub.s32 %v986, %v988
        %v990 = vrot.slane %v980, %v989
        %v992 = vunpack.c.l.s4 1966171168
        %v993 = vunpack.c.0.s8 %v992
        %v994 = vlaneseq
        %v995 = vshrl.u32 %v994, 7
        %v996 = vsub.s32 %v993, %v995
        %v997 = vrot.slane %v981, %v996
        %v999 = vunpack.c.l.s4 1966171168
        %v1000 = vunpack.c.0.s8 %v999
        %v1001 = vlaneseq
        %v1002 = vshrl.u32 %v1001, 7
        %v1003 = vsub.s32 %v1000, %v1002
        %v1004 = vrot.slane %v982, %v1003
        %v1006 = vunpack.c.l.s4 1966171168
        %v1007 = vunpack.c.0.s8 %v1006
        %v1008 = vlaneseq
        %v1009 = vshrl.u32 %v1008, 7
        %v1010 = vsub.s32 %v1007, %v1009
        %v1011 = vrot.slane %v983, %v1010
        %v1012 = vcombine.low %v990, %v1004
        %v1013 = vcombine.low %v997, %v1011
        %1016 = vst [vmem:[%s188] sm:$0xff] %v1012
        %1017 = vst [vmem:[%s188 + $0x8] sm:$0xff] %v1013
        %s1018 = sand.u32 %s96, 1
        %s1019 = scalar_lea.sflag [#allocation4], %s1018
        %s1020 = sand.u32 %s96, 1
        %s1021 = smul.addr %s1020, 16
        %s1022 = scalar_lea.vmem [#allocation5], %s1021
        // Predicated region
        $region37: #{tpu_custom_call.1} parent=31 // pred_check
          %p1023 = pneg %p106
        $region38: #{tpu_custom_call.1} parent=31 // pred_check_branch
          %1025 = sbr.rel (%p1023) target = $region40
        $region39: #{tpu_custom_call.1} parent=31 // pred_region
          %s1027 = ssub.s32 256, 256
          %1028 = vsyncadd %s1019, %s1027
          %s1029 = smul.addr %s20, 2
          %s1030 = smul.addr %s1029, 128
          %s1031 = scalar_lea.hbm %s3, %s1030
          %s1033 = sshll.u32 %s1022, 4
          %s1034 = int_to_ptr.vmem [resolvable:$true] %s1033
          %1036 = dma.vmem_to_hbm [thread:$0]  %s1034, 256, %s1031, %s1019
        $region40: #{tpu_custom_call.1} parent=31 // pred_fallthru
          _
      $region32: #{tpu_custom_call.1} parent=5 // pred_fallthru
        _
      %p1037 = scmp.le.s32.totalorder 2, %s15
      // Predicated region
      $region41: #{tpu_custom_call.1} parent=5 // pred_check
        %p1038 = pneg %p1037
      $region42: #{tpu_custom_call.1} parent=5 // pred_check_branch
        %1040 = sbr.rel (%p1038) target = $region44
      $region43: #{tpu_custom_call.1} parent=5 // pred_region
        %s1041 = ssub.s32 %s15, 2
        // Predicated region
        $region45: #{tpu_custom_call.1} parent=43 // pred_check
          %p1042 = pneg %p112
        $region46: #{tpu_custom_call.1} parent=43 // pred_check_branch
          %1044 = sbr.rel (%p1042) target = $region48
        $region47: #{tpu_custom_call.1} parent=43 // pred_region
          %s1045 = sand.u32 %s97, 1
          %s1046 = scalar_lea.sflag [#allocation4], %s1045
          %s1047 = sand.u32 %s97, 1
          %s1048 = smul.addr %s1047, 16
          %s1049 = scalar_lea.vmem [#allocation5], %s1048
          %1050 = dma.done %s1046, 256
        $region48: #{tpu_custom_call.1} parent=43 // pred_fallthru
          _
      $region44: #{tpu_custom_call.1} parent=5 // pred_fallthru
        _
    $region6: #{tpu_custom_call.1} parent=1 // loop_footer
      %s19 = sadd.s32 1, %s15
    $region7: #{tpu_custom_call.1} parent=1 // loop_footer_branch
      %14 = sbr.rel target = $region3
    $region8: #{tpu_custom_call.1} parent=1 // loop_exit
      _
    %1051 = vsyncpa [#allocation3], 1
    %s1052 = scalar_lea.sflag [#allocation3], 1
    %1053 = vsyncpa %s1052, 1
    %1054 = vsyncpa [#allocation4], 1
    %s1055 = scalar_lea.sflag [#allocation4], 1
    %1056 = vsyncpa %s1055, 1

</llo_original>
